<compile_context>
chip_gen: v5e
topology: v5e:2x2
jax: 0.10.0
libtpu: 0.0.40
codegen_flags: <defaults>
</compile_context>

<pallas_src>
import functools

import jax
import jax.numpy as jnp
from jax.experimental import pallas as pl
from jax.experimental.pallas import tpu as pltpu

L1_COEF = 0.001
_LANES = 128
_SUBLANES = 8


def _round_up(x, m):
    return ((x + m - 1) // m) * m


def _spec(shape, index_map, *, single_buffer=False):
    """BlockSpec; single_buffer=True requests 1-deep pipelining (for resident,
    constant-index operands so the pipeline does not double-buffer them)."""
    if single_buffer:
        try:
            return pl.BlockSpec(shape, index_map, pipeline_mode=pl.Buffered(1))
        except Exception:  # pragma: no cover - older jax without pipeline_mode
            return pl.BlockSpec(shape, index_map)
    return pl.BlockSpec(shape, index_map)


def _sae_kernel(x_ref, we_ref, be_ref, wd_ref, bd_ref,
                dec_ref, enc_ref, part_ref, acc_ref,
                *, tile_b, batch, num_b_tiles, needs_mask):
    i = pl.program_id(0)            # batch tile    (parallel)
    j = pl.program_id(1)            # hidden block  (arbitrary / reduction)
    nj = pl.num_programs(1)

    @pl.when(j == 0)
    def _():
        acc_ref[...] = jnp.zeros_like(acc_ref)
        part_ref[...] = jnp.zeros_like(part_ref)

    x = x_ref[...]                                             # (TILE_B, Din_p)

    # ---- encode chunk: ReLU(x @ We[:, blk] + be[blk]).
    #      Native-dtype MXU operands (pass bf16 for peak), f32 accumulation.
    pre = jnp.dot(x, we_ref[...], preferred_element_type=jnp.float32)
    pre = pre + be_ref[...].astype(jnp.float32)                # (TILE_B, TILE_H)
    h = jnp.maximum(pre, 0.0)
    enc_ref[...] = h.astype(enc_ref.dtype)

    # ---- decode partial: accumulate h[blk] @ Wd[blk, :] into f32 scratch.
    acc_ref[...] += jnp.dot(h.astype(wd_ref.dtype), wd_ref[...],
                            preferred_element_type=jnp.float32)

    lane = jax.lax.broadcasted_iota(jnp.int32, part_ref.shape, 2)

    def l1l0_update(valid):
        hm = h if valid is None else h * valid
        l1 = jnp.sum(hm)                          # h >= 0 after ReLU => |h| == h
        l0 = jnp.sum((hm > 0.0).astype(jnp.float32))
        part_ref[...] += jnp.where(lane == 1, l1,
                          jnp.where(lane == 2, l0, 0.0))

    def finalize(valid):
        dec = acc_ref[...] + bd_ref[...].astype(jnp.float32)
        dec_ref[...] = dec.astype(dec_ref.dtype)
        # Loss math stays in f32 (slightly more accurate than a framework
        # computing MSE on a bf16 decoded tensor).
        diff = dec - x.astype(jnp.float32)
        if valid is not None:
            diff = diff * valid
        part_ref[...] += jnp.where(lane == 0, jnp.sum(diff * diff), 0.0)

    if needs_mask:
        # Only the LAST batch tile contains padded rows; keep the unmasked
        # fast path (no extra full-tile VPU multiplies) for all other tiles.
        row = jax.lax.broadcasted_iota(jnp.int32, (tile_b, 1), 0) + i * tile_b
        valid = (row < batch).astype(jnp.float32)
        is_last_b = i == num_b_tiles - 1

        @pl.when(is_last_b)
        def _():
            l1l0_update(valid)

        @pl.when(jnp.logical_not(is_last_b))
        def _():
            l1l0_update(None)

        @pl.when(j == nj - 1)
        def _():
            @pl.when(is_last_b)
            def _():
                finalize(valid)

            @pl.when(jnp.logical_not(is_last_b))
            def _():
                finalize(None)
    else:
        l1l0_update(None)

        @pl.when(j == nj - 1)
        def _():
            finalize(None)


def _pad2d(a, rows, cols, dtype):
    if a.shape == (rows, cols) and a.dtype == jnp.dtype(dtype):
        return a
    out = jnp.zeros((rows, cols), dtype)
    return out.at[:a.shape[0], :a.shape[1]].set(a.astype(dtype))


def pad_params(w_enc, b_enc, w_dec, b_dec, *, compute_dtype=None):
    """Zero-pad feature dims to 128-lane multiples and cast weights ONCE.

    Call this outside the hot path (e.g. once per training step set-up) and
    pass the result to sae_forward(..., padded_params=...) so each forward
    call does not re-materialize padded weight copies in HBM."""
    d_in, d_hid = w_enc.shape
    assert w_dec.shape == (d_hid, d_in)
    cdt = compute_dtype if compute_dtype is not None else w_enc.dtype
    din_p = _round_up(d_in, _LANES)
    dh_p = _round_up(d_hid, _LANES)
    wep = _pad2d(w_enc, din_p, dh_p, cdt)
    wdp = _pad2d(w_dec, dh_p, din_p, cdt)
    bep = _pad2d(b_enc.reshape(1, -1), 1, dh_p, jnp.float32)   # biases kept f32
    bdp = _pad2d(b_dec.reshape(1, -1), 1, din_p, jnp.float32)
    return {"w_enc": wep, "b_enc": bep, "w_dec": wdp, "b_dec": bdp,
            "d_input": d_in, "d_hidden": d_hid, "compute_dtype": cdt}


def _vmem_budget():
    """Per-TensorCore VMEM we allow the kernel to use (capacity - headroom)."""
    try:
        cap = int(pltpu.get_tpu_info().vmem_capacity_bytes)
    except Exception:
        cap = 64 << 20            # conservative fallback (v7x per-TC size)
    headroom = max(8 << 20, cap // 8)   # compiler internal scratch etc.
    return cap - headroom               # ~112 MiB on v5e/v6e, ~56 MiB on v7x


def _select_tiles(B, din_p, dh_p, csize, osize, budget, tile_b):
    """Pick (tile_b, tile_h).  Prefer fully VMEM-resident weights (tile_h ==
    dh_p, single-buffered); fall back to streaming hidden blocks."""
    def usage(tb, th, w_bufs):
        w = (din_p * th + th * din_p) * csize * w_bufs      # W_enc + W_dec blocks
        w += th * 4 * w_bufs + din_p * 4                    # b_enc blocks + b_dec
        act = tb * din_p * csize * 2                        # x tile (dbl-buffered)
        act += tb * din_p * osize * 2                       # decoded tile
        act += tb * th * osize * 2                          # encoded tile
        act += _SUBLANES * _LANES * 4 * 2                   # loss partials
        scratch = tb * din_p * 4                            # f32 decode acc
        return w + act + scratch + (1 << 20)                # + small slack

    cap_b = _round_up(B, _SUBLANES)
    if tile_b is not None:
        b_cands = [_round_up(min(tile_b, cap_b), _SUBLANES)]
    else:
        b_cands = sorted({min(c, cap_b) for c in (512, 256, 128, 64, 32, 16, 8)},
                         reverse=True)
    h_cands = sorted({min(c, dh_p) for c in (dh_p, 4096, 2048, 1024, 512, 256, 128)},
                     reverse=True)

    # Phase 1: full weight matrices resident (single-buffered), biggest tile_b.
    for tb in b_cands:
        if usage(tb, dh_p, 1) <= budget:
            return tb, dh_p
    # Phase 2: stream the hidden dim in blocks (double-buffered weight blocks).
    for tb in b_cands:
        for th in h_cands:
            if th == dh_p:
                continue
            if usage(tb, th, 2) <= budget:
                return tb, th
    # Fallback: smallest config; let the compiler try.
    return b_cands[-1], h_cands[-1]


def sae_forward(x, w_enc=None, b_enc=None, w_dec=None, b_dec=None, *,
                l1_coef=L1_COEF, tile_b=None, compute_dtype=None,
                padded_params=None):
    """SAE forward.  x: (B, d_input).  w_enc: (d_input, d_hidden) == PyTorch
    encoder.weight.T, w_dec: (d_hidden, d_input) == PyTorch decoder.weight.T.
    Pass padded_params=pad_params(...) to hoist padding/casting off the hot
    path; pass compute_dtype=jnp.bfloat16 for MXU-peak matmuls."""
    if padded_params is None:
        padded_params = pad_params(w_enc, b_enc, w_dec, b_dec,
                                   compute_dtype=compute_dtype)
    p = padded_params
    d_in, d_hid = p["d_input"], p["d_hidden"]
    cdt = p["compute_dtype"]
    wep, bep, wdp, bdp = p["w_enc"], p["b_enc"], p["w_dec"], p["b_dec"]
    din_p, dh_p = wep.shape

    B = x.shape[0]
    assert x.shape == (B, d_in)

    out_dtype = cdt
    csize = jnp.dtype(cdt).itemsize
    osize = jnp.dtype(out_dtype).itemsize

    budget = _vmem_budget()
    tile_b, tile_h = _select_tiles(B, din_p, dh_p, csize, osize, budget, tile_b)

    b_p = _round_up(B, tile_b)
    num_b_tiles = b_p // tile_b
    num_h_tiles = dh_p // tile_h
    needs_mask = b_p != B

    # x: pad batch rows / lanes only when needed (fast path if already aligned).
    if x.shape == (b_p, din_p) and x.dtype == jnp.dtype(cdt):
        xp = x
    else:
        xp = jnp.zeros((b_p, din_p), cdt).at[:B, :d_in].set(x.astype(cdt))

    kernel = functools.partial(_sae_kernel, tile_b=tile_b, batch=B,
                               num_b_tiles=num_b_tiles, needs_mask=needs_mask)

    resident_w = num_h_tiles == 1   # weights never move across the grid

    in_specs = [
        pl.BlockSpec((tile_b, din_p), lambda i, j: (i, 0)),                     # x
        _spec((din_p, tile_h), lambda i, j: (0, j), single_buffer=resident_w),  # W_enc
        _spec((1, tile_h), lambda i, j: (0, j), single_buffer=resident_w),      # b_enc
        _spec((tile_h, din_p), lambda i, j: (j, 0), single_buffer=resident_w),  # W_dec
        _spec((1, din_p), lambda i, j: (0, 0), single_buffer=True),             # b_dec
    ]
    out_specs = (
        pl.BlockSpec((tile_b, din_p), lambda i, j: (i, 0)),                # decoded
        pl.BlockSpec((tile_b, tile_h), lambda i, j: (i, j)),               # encoded
        pl.BlockSpec((1, _SUBLANES, _LANES), lambda i, j: (i, 0, 0)),      # partials
    )

    vmem_limit = int(max(budget, 32 << 20))

    flops = 4 * b_p * din_p * dh_p            # two matmuls, 2 flops/MAC
    weight_reads = 1 if resident_w else num_b_tiles
    bytes_accessed = int(xp.size * csize
                         + (wep.size + wdp.size) * csize * weight_reads
                         + b_p * din_p * osize + b_p * dh_p * osize)

    dec_p, enc_p, partials = pl.pallas_call(
        kernel,
        out_shape=(
            jax.ShapeDtypeStruct((b_p, din_p), out_dtype),                 # decoded
            jax.ShapeDtypeStruct((b_p, dh_p), out_dtype),                  # encoded
            jax.ShapeDtypeStruct((num_b_tiles, _SUBLANES, _LANES), jnp.float32),
        ),
        grid=(num_b_tiles, num_h_tiles),
        in_specs=in_specs,
        out_specs=out_specs,
        scratch_shapes=[pltpu.VMEM((tile_b, din_p), jnp.float32)],         # decode acc
        compiler_params=pltpu.CompilerParams(
            dimension_semantics=("parallel", "arbitrary"),
            vmem_limit_bytes=vmem_limit,
        ),
        cost_estimate=pl.CostEstimate(
            flops=flops, transcendentals=0, bytes_accessed=bytes_accessed),
    )(xp, wep, bep, wdp, bdp)

    decoded = dec_p[:B, :d_in]
    encoded = enc_p[:B, :d_hid]

    sums = jnp.sum(partials[:, 0, :3], axis=0)       # [SSE, sum|h|, count(h>0)]
    recon = sums[0] / (B * d_in)
    l1 = sums[1] / (B * d_hid)
    l0 = sums[2] / (B * d_hid)
    loss = recon + l1 * l1_coef

    return {"decoded": decoded, "encoded": encoded, "loss": loss,
            "recon_loss": recon, "l1_loss": l1, "l0_loss": l0}


def init_params(key, d_input, d_hidden, dtype=jnp.float32):
    """Deterministic init mimicking nn.Linear (uniform +-1/sqrt(fan_in))."""
    k1, k2, k3, k4 = jax.random.split(key, 4)
    lim_e = 1.0 / jnp.sqrt(d_input)
    lim_d = 1.0 / jnp.sqrt(d_hidden)
    # stored pre-transposed: (fan_in, fan_out)
    w_enc = jax.random.uniform(k1, (d_input, d_hidden), dtype, -lim_e, lim_e)
    b_enc = jax.random.uniform(k2, (d_hidden,), dtype, -lim_e, lim_e)
    w_dec = jax.random.uniform(k3, (d_hidden, d_input), dtype, -lim_d, lim_d)
    b_dec = jax.random.uniform(k4, (d_input,), dtype, -lim_d, lim_d)
    return w_enc, b_enc, w_dec, b_dec


if __name__ == "__main__":
    B, D_IN, D_HID = 8, 64, 128

    key = jax.random.PRNGKey(0)
    kx, kp = jax.random.split(key)
    x = jax.random.normal(kx, (B, D_IN), jnp.float32)
    w_enc, b_enc, w_dec, b_dec = init_params(kp, D_IN, D_HID)

    # ---- plain-JAX reference
    h_ref = jnp.maximum(x @ w_enc + b_enc, 0.0)
    dec_ref = h_ref @ w_dec + b_dec
    recon_ref = jnp.mean((dec_ref - x) ** 2)
    l1_ref = jnp.mean(jnp.abs(h_ref))
    l0_ref = jnp.mean((h_ref != 0).astype(jnp.float32))

    # ---- f32 path: tight tolerances.
    out = jax.block_until_ready(sae_forward(x, w_enc, b_enc, w_dec, b_dec))
    assert jnp.allclose(out["decoded"], dec_ref, atol=1e-5)
    assert jnp.allclose(out["encoded"], h_ref, atol=1e-5)
    assert jnp.allclose(out["recon_loss"], recon_ref, atol=1e-5)
    assert jnp.allclose(out["l1_loss"], l1_ref, atol=1e-5)
    assert jnp.allclose(out["l0_loss"], l0_ref, atol=1e-5)
    assert jnp.allclose(out["loss"], recon_ref + l1_ref * L1_COEF, atol=1e-5)

    # ---- non-tile-aligned batch: exercises the masked last-tile path.
    x5 = x[:5]
    out5 = jax.block_until_ready(sae_forward(x5, w_enc, b_enc, w_dec, b_dec))
    h5, dec5 = h_ref[:5], dec_ref[:5]
    assert jnp.allclose(out5["decoded"], dec5, atol=1e-5)
    assert jnp.allclose(out5["recon_loss"], jnp.mean((dec5 - x5) ** 2), atol=1e-5)
    assert jnp.allclose(out5["l1_loss"], jnp.mean(jnp.abs(h5)), atol=1e-5)
    assert jnp.allclose(out5["l0_loss"],
                        jnp.mean((h5 != 0).astype(jnp.float32)), atol=1e-5)

    # ---- bf16 MXU-peak path: weight padding/cast hoisted once via pad_params,
    #      loose tolerances vs. the f32 reference.
    pp = pad_params(w_enc, b_enc, w_dec, b_dec, compute_dtype=jnp.bfloat16)
    out_bf = jax.block_until_ready(sae_forward(x, padded_params=pp))
    assert jnp.allclose(out_bf["decoded"].astype(jnp.float32), dec_ref,
                        atol=0.1, rtol=0.1)
    assert jnp.allclose(out_bf["recon_loss"], recon_ref, atol=0.05, rtol=0.05)
    assert jnp.allclose(out_bf["l1_loss"], l1_ref, atol=0.05, rtol=0.05)

    print("KERNEL_OK")
</pallas_src>

<mosaic_0001>
module attributes {stable_mosaic.version = 11 : i64} {
  func.func @_sae_kernel(%arg0: i32, %arg1: i32, %arg2: memref<8x128xf32, #tpu.memory_space<vmem>>, %arg3: memref<128x128xf32, #tpu.memory_space<vmem>>, %arg4: memref<1x128xf32, #tpu.memory_space<vmem>>, %arg5: memref<128x128xf32, #tpu.memory_space<vmem>>, %arg6: memref<1x128xf32, #tpu.memory_space<vmem>>, %arg7: memref<8x128xf32, #tpu.memory_space<vmem>>, %arg8: memref<8x128xf32, #tpu.memory_space<vmem>>, %arg9: memref<1x8x128xf32, #tpu.memory_space<vmem>>, %arg10: memref<8x128xf32, #tpu.memory_space<vmem>>) attributes {dimension_semantics = [#tpu.dimension_semantics<parallel>, #tpu.dimension_semantics<arbitrary>], iteration_bounds = array<i64: 1, 1>, scalar_prefetch = 0 : i64, scratch_operands = 1 : i64, tpu.core_type = #tpu.core_type<tc>, window_params = [{transform_indices = @transform_0, window_bounds = array<i64: 8, 128>}, {pipeline_mode = #tpu.pipeline_mode<synchronous>, transform_indices = @transform_1, window_bounds = array<i64: 128, 128>}, {pipeline_mode = #tpu.pipeline_mode<synchronous>, transform_indices = @transform_2, window_bounds = array<i64: 1, 128>}, {pipeline_mode = #tpu.pipeline_mode<synchronous>, transform_indices = @transform_3, window_bounds = array<i64: 128, 128>}, {pipeline_mode = #tpu.pipeline_mode<synchronous>, transform_indices = @transform_4, window_bounds = array<i64: 1, 128>}, {transform_indices = @transform_5, window_bounds = array<i64: 8, 128>}, {transform_indices = @transform_6, window_bounds = array<i64: 8, 128>}, {transform_indices = @transform_7, window_bounds = array<i64: 1, 8, 128>}]} {
    %c0_i32 = arith.constant 0 : i32
    %0 = arith.cmpi eq, %arg1, %c0_i32 : i32
    %1 = arith.extui %0 : i1 to i32
    %c0_i32_0 = arith.constant 0 : i32
    %2 = arith.cmpi ne, %1, %c0_i32_0 : i32
    scf.if %2 {
      %cst_28 = arith.constant 0.000000e+00 : f32
      %45 = vector.broadcast %cst_28 : f32 to vector<8x128xf32>
      %c0_29 = arith.constant 0 : index
      %c0_30 = arith.constant 0 : index
      %46 = vector.load %arg10[%c0_29, %c0_30] : memref<8x128xf32, #tpu.memory_space<vmem>>, vector<8x128xf32>
      tpu.vector_store %arg10[%c0_29, %c0_30], %45 {strides = array<i32>} : memref<8x128xf32, #tpu.memory_space<vmem>>, vector<8x128xf32>,
      %cst_31 = arith.constant 0.000000e+00 : f32
      %47 = vector.broadcast %cst_31 : f32 to vector<1x8x128xf32>
      %c0_32 = arith.constant 0 : index
      %c0_33 = arith.constant 0 : index
      %c0_34 = arith.constant 0 : index
      %48 = vector.load %arg9[%c0_32, %c0_33, %c0_34] : memref<1x8x128xf32, #tpu.memory_space<vmem>>, vector<1x8x128xf32>
      tpu.vector_store %arg9[%c0_32, %c0_33, %c0_34], %47 {strides = array<i32>} : memref<1x8x128xf32, #tpu.memory_space<vmem>>, vector<1x8x128xf32>,
    } else {
    }
    %c0 = arith.constant 0 : index
    %c0_1 = arith.constant 0 : index
    %3 = vector.load %arg2[%c0, %c0_1] : memref<8x128xf32, #tpu.memory_space<vmem>>, vector<8x128xf32>
    %c0_2 = arith.constant 0 : index
    %c0_3 = arith.constant 0 : index
    %4 = vector.load %arg3[%c0_2, %c0_3] : memref<128x128xf32, #tpu.memory_space<vmem>>, vector<128x128xf32>
    %cst = arith.constant dense<0.000000e+00> : vector<8x128xf32>
    %5 = tpu.matmul %3, %4, %cst {dimension_numbers = #tpu.dot_dimension_numbers<[1], [0], [0], [1], [0, 0, 1, 1], [], []>} : vector<8x128xf32>, vector<128x128xf32>, vector<8x128xf32> -> vector<8x128xf32>
    %c0_4 = arith.constant 0 : index
    %c0_5 = arith.constant 0 : index
    %6 = vector.load %arg4[%c0_4, %c0_5] : memref<1x128xf32, #tpu.memory_space<vmem>>, vector<1x128xf32>
    %7 = vector.broadcast %6 : vector<1x128xf32> to vector<8x128xf32>
    %8 = arith.addf %5, %7 : vector<8x128xf32>
    %cst_6 = arith.constant 0.000000e+00 : f32
    %9 = vector.broadcast %cst_6 : f32 to vector<8x128xf32>
    %10 = arith.maximumf %8, %9 : vector<8x128xf32>
    %c0_7 = arith.constant 0 : index
    %c0_8 = arith.constant 0 : index
    %11 = vector.load %arg8[%c0_7, %c0_8] : memref<8x128xf32, #tpu.memory_space<vmem>>, vector<8x128xf32>
    tpu.vector_store %arg8[%c0_7, %c0_8], %10 {strides = array<i32>} : memref<8x128xf32, #tpu.memory_space<vmem>>, vector<8x128xf32>,
    %c0_9 = arith.constant 0 : index
    %c0_10 = arith.constant 0 : index
    %12 = vector.load %arg10[%c0_9, %c0_10] : memref<8x128xf32, #tpu.memory_space<vmem>>, vector<8x128xf32>
    %c0_11 = arith.constant 0 : index
    %c0_12 = arith.constant 0 : index
    %13 = vector.load %arg5[%c0_11, %c0_12] : memref<128x128xf32, #tpu.memory_space<vmem>>, vector<128x128xf32>
    %cst_13 = arith.constant dense<0.000000e+00> : vector<8x128xf32>
    %14 = tpu.matmul %10, %13, %cst_13 {dimension_numbers = #tpu.dot_dimension_numbers<[1], [0], [0], [1], [0, 0, 1, 1], [], []>} : vector<8x128xf32>, vector<128x128xf32>, vector<8x128xf32> -> vector<8x128xf32>
    %15 = arith.addf %12, %14 : vector<8x128xf32>
    %c0_14 = arith.constant 0 : index
    %c0_15 = arith.constant 0 : index
    %16 = vector.load %arg10[%c0_14, %c0_15] : memref<8x128xf32, #tpu.memory_space<vmem>>, vector<8x128xf32>
    tpu.vector_store %arg10[%c0_14, %c0_15], %15 {strides = array<i32>} : memref<8x128xf32, #tpu.memory_space<vmem>>, vector<8x128xf32>,
    %17 = tpu.iota {dimensions = array<i32: 2>} : vector<1x8x128xi32>
    %18 = vector.shape_cast %10 : vector<8x128xf32> to vector<1x8x128xf32>
    %cst_16 = arith.constant dense<0.000000e+00> : vector<1xf32>
    %19 = vector.multi_reduction <add>, %18, %cst_16 [1, 2] : vector<1x8x128xf32> to vector<1xf32>
    %20 = vector.shape_cast %19 : vector<1xf32> to vector<1x1x1xf32>
    %21 = vector.extract %20[0, 0, 0] : f32 from vector<1x1x1xf32>
    %cst_17 = arith.constant 0.000000e+00 : f32
    %22 = vector.broadcast %cst_17 : f32 to vector<8x128xf32>
    %23 = arith.cmpf ogt, %10, %22 : vector<8x128xf32>
    %24 = arith.extui %23 : vector<8x128xi1> to vector<8x128xi32>
    %25 = arith.sitofp %24 : vector<8x128xi32> to vector<8x128xf32>
    %26 = vector.shape_cast %25 : vector<8x128xf32> to vector<1x8x128xf32>
    %cst_18 = arith.constant dense<0.000000e+00> : vector<1xf32>
    %27 = vector.multi_reduction <add>, %26, %cst_18 [1, 2] : vector<1x8x128xf32> to vector<1xf32>
    %28 = vector.shape_cast %27 : vector<1xf32> to vector<1x1x1xf32>
    %29 = vector.extract %28[0, 0, 0] : f32 from vector<1x1x1xf32>
    %c0_19 = arith.constant 0 : index
    %c0_20 = arith.constant 0 : index
    %c0_21 = arith.constant 0 : index
    %30 = vector.load %arg9[%c0_19, %c0_20, %c0_21] : memref<1x8x128xf32, #tpu.memory_space<vmem>>, vector<1x8x128xf32>
    %c1_i32 = arith.constant 1 : i32
    %31 = vector.broadcast %c1_i32 : i32 to vector<1x8x128xi32>
    %32 = arith.cmpi eq, %17, %31 : vector<1x8x128xi32>
    %c2_i32 = arith.constant 2 : i32
    %33 = vector.broadcast %c2_i32 : i32 to vector<1x8x128xi32>
    %34 = arith.cmpi eq, %17, %33 : vector<1x8x128xi32>
    %cst_22 = arith.constant 0.000000e+00 : f32
    %35 = vector.broadcast %29 : f32 to vector<1x8x128xf32>
    %36 = vector.broadcast %cst_22 : f32 to vector<1x8x128xf32>
    %37 = arith.select %34, %35, %36 : vector<1x8x128xi1>, vector<1x8x128xf32>
    %38 = vector.broadcast %21 : f32 to vector<1x8x128xf32>
    %39 = arith.select %32, %38, %37 : vector<1x8x128xi1>, vector<1x8x128xf32>
    %40 = arith.addf %30, %39 : vector<1x8x128xf32>
    %c0_23 = arith.constant 0 : index
    %c0_24 = arith.constant 0 : index
    %c0_25 = arith.constant 0 : index
    %41 = vector.load %arg9[%c0_23, %c0_24, %c0_25] : memref<1x8x128xf32, #tpu.memory_space<vmem>>, vector<1x8x128xf32>
    tpu.vector_store %arg9[%c0_23, %c0_24, %c0_25], %40 {strides = array<i32>} : memref<1x8x128xf32, #tpu.memory_space<vmem>>, vector<1x8x128xf32>,
    %c0_i32_26 = arith.constant 0 : i32
    %42 = arith.cmpi eq, %arg1, %c0_i32_26 : i32
    %43 = arith.extui %42 : i1 to i32
    %c0_i32_27 = arith.constant 0 : i32
    %44 = arith.cmpi ne, %43, %c0_i32_27 : i32
    scf.if %44 {
      %c0_28 = arith.constant 0 : index
      %c0_29 = arith.constant 0 : index
      %45 = vector.load %arg10[%c0_28, %c0_29] : memref<8x128xf32, #tpu.memory_space<vmem>>, vector<8x128xf32>
      %c0_30 = arith.constant 0 : index
      %c0_31 = arith.constant 0 : index
      %46 = vector.load %arg6[%c0_30, %c0_31] : memref<1x128xf32, #tpu.memory_space<vmem>>, vector<1x128xf32>
      %47 = vector.broadcast %46 : vector<1x128xf32> to vector<8x128xf32>
      %48 = arith.addf %45, %47 : vector<8x128xf32>
      %c0_32 = arith.constant 0 : index
      %c0_33 = arith.constant 0 : index
      %49 = vector.load %arg7[%c0_32, %c0_33] : memref<8x128xf32, #tpu.memory_space<vmem>>, vector<8x128xf32>
      tpu.vector_store %arg7[%c0_32, %c0_33], %48 {strides = array<i32>} : memref<8x128xf32, #tpu.memory_space<vmem>>, vector<8x128xf32>,
      %50 = arith.subf %48, %3 : vector<8x128xf32>
      %c0_34 = arith.constant 0 : index
      %c0_35 = arith.constant 0 : index
      %c0_36 = arith.constant 0 : index
      %51 = vector.load %arg9[%c0_34, %c0_35, %c0_36] : memref<1x8x128xf32, #tpu.memory_space<vmem>>, vector<1x8x128xf32>
      %c0_i32_37 = arith.constant 0 : i32
      %52 = vector.broadcast %c0_i32_37 : i32 to vector<1x8x128xi32>
      %53 = arith.cmpi eq, %17, %52 : vector<1x8x128xi32>
      %54 = arith.mulf %50, %50 : vector<8x128xf32>
      %55 = vector.shape_cast %54 : vector<8x128xf32> to vector<1x8x128xf32>
      %cst_38 = arith.constant dense<0.000000e+00> : vector<1xf32>
      %56 = vector.multi_reduction <add>, %55, %cst_38 [1, 2] : vector<1x8x128xf32> to vector<1xf32>
      %57 = vector.shape_cast %56 : vector<1xf32> to vector<1x1x1xf32>
      %58 = vector.extract %57[0, 0, 0] : f32 from vector<1x1x1xf32>
      %cst_39 = arith.constant 0.000000e+00 : f32
      %59 = vector.broadcast %58 : f32 to vector<1x8x128xf32>
      %60 = vector.broadcast %cst_39 : f32 to vector<1x8x128xf32>
      %61 = arith.select %53, %59, %60 : vector<1x8x128xi1>, vector<1x8x128xf32>
      %62 = arith.addf %51, %61 : vector<1x8x128xf32>
      %c0_40 = arith.constant 0 : index
      %c0_41 = arith.constant 0 : index
      %c0_42 = arith.constant 0 : index
      %63 = vector.load %arg9[%c0_40, %c0_41, %c0_42] : memref<1x8x128xf32, #tpu.memory_space<vmem>>, vector<1x8x128xf32>
      tpu.vector_store %arg9[%c0_40, %c0_41, %c0_42], %62 {strides = array<i32>} : memref<1x8x128xf32, #tpu.memory_space<vmem>>, vector<1x8x128xf32>,
    } else {
    }
    return
  }
  func.func @transform_0(%arg0: i32, %arg1: i32) -> (i32, i32) {
    %c0_i32 = arith.constant 0 : i32
    %c0_i32_0 = arith.constant 0 : i32
    return %arg0, %c0_i32 : i32, i32
  }
  func.func @transform_1(%arg0: i32, %arg1: i32) -> (i32, i32) {
    %c0_i32 = arith.constant 0 : i32
    %c0_i32_0 = arith.constant 0 : i32
    return %c0_i32, %arg1 : i32, i32
  }
  func.func @transform_2(%arg0: i32, %arg1: i32) -> (i32, i32) {
    %c0_i32 = arith.constant 0 : i32
    %c0_i32_0 = arith.constant 0 : i32
    return %c0_i32, %arg1 : i32, i32
  }
  func.func @transform_3(%arg0: i32, %arg1: i32) -> (i32, i32) {
    %c0_i32 = arith.constant 0 : i32
    %c0_i32_0 = arith.constant 0 : i32
    return %arg1, %c0_i32 : i32, i32
  }
  func.func @transform_4(%arg0: i32, %arg1: i32) -> (i32, i32) {
    %c0_i32 = arith.constant 0 : i32
    %c0_i32_0 = arith.constant 0 : i32
    %c0_i32_1 = arith.constant 0 : i32
    return %c0_i32, %c0_i32_0 : i32, i32
  }
  func.func @transform_5(%arg0: i32, %arg1: i32) -> (i32, i32) {
    %c0_i32 = arith.constant 0 : i32
    %c0_i32_0 = arith.constant 0 : i32
    return %arg0, %c0_i32 : i32, i32
  }
  func.func @transform_6(%arg0: i32, %arg1: i32) -> (i32, i32) {
    %c0_i32 = arith.constant 0 : i32
    return %arg0, %arg1 : i32, i32
  }
  func.func @transform_7(%arg0: i32, %arg1: i32) -> (i32, i32, i32) {
    %c0_i32 = arith.constant 0 : i32
    %c0_i32_0 = arith.constant 0 : i32
    %c0_i32_1 = arith.constant 0 : i32
    return %arg0, %c0_i32, %c0_i32_0 : i32, i32, i32
  }
}

</mosaic_0001>

<llo_original>
// kernel: tpu_custom_call.1
$region0: #{tpu_custom_call.1}
  #allocation0 [shape = 'u32[]', space=smem, size = 0x4, offset = 0x4, fixed_abs, tag = 'smem constant byte address 0x4 - core index']
  #allocation1 [shape = 'u32[72,128]{1,0:T(1,128)}', space=vmem, size = 0x9000, scoped, tag = 'internal scratch']
  #allocation2 [shape = 'f32[8,128]{1,0:T(8,128)}', space=vmem, size = 0x1000, scoped, tag = 'scratch operand']
  %s0 = inlined_call_operand.hbm [shape: f32[8,128], index: 0, kind: input, shape index: {}]
  %s1 = inlined_call_operand.hbm [shape: f32[128,128], index: 1, kind: input, shape index: {}]
  %s2 = inlined_call_operand.vmem [shape: f32[1,128], index: 2, kind: input, shape index: {}]
  %s3 = inlined_call_operand.hbm [shape: f32[128,128], index: 3, kind: input, shape index: {}]
  %s4 = inlined_call_operand.vmem [shape: f32[1,128], index: 4, kind: input, shape index: {}]
  %s5 = inlined_call_operand.hbm [shape: f32[8,128], index: 5, kind: output, shape index: {0}]
  %s6 = inlined_call_operand.hbm [shape: f32[8,128], index: 6, kind: output, shape index: {1}]
  %s7 = inlined_call_operand.hbm [shape: f32[1,8,128], index: 7, kind: output, shape index: {2}]
  %8 = xla_tuple %s5, %s6, %s7
  %s9 = sld [smem:[#allocation0]]
  $region66: #{tpu_custom_call.1} parent=0
    _
  %s11 = ssub.s32 1, %s9
  %s12 = scalar_select 0, %s11, %s9
  $region1: #{tpu_custom_call.1} parent=0
    #allocation3 [shape = 'u8[4096]{0}', space=vmem, size = 0x1000, scoped, tag = 'input window, operand 0, single buffered']
    #allocation4 [shape = 's32[1]{0}', space=sflag, size = 0x4, scoped, tag = 'scoped memory for tpu_custom_call.1']
    #allocation5 [shape = 's32[1]{0}', space=sflag, size = 0x4, scoped, tag = 'scoped memory for tpu_custom_call.1']
    #allocation6 [shape = 'u8[65536]{0}', space=vmem, size = 0x10000, scoped, tag = 'input window, operand 1, single buffered']
    #allocation7 [shape = 's32[1]{0}', space=sflag, size = 0x4, scoped, tag = 'scoped memory for tpu_custom_call.1']
    #allocation8 [shape = 'u8[65536]{0}', space=vmem, size = 0x10000, scoped, tag = 'input window, operand 3, single buffered']
    #allocation9 [shape = 'u8[4096]{0}', space=vmem, size = 0x1000, scoped, tag = 'output window, operand 0, single buffered']
    #allocation10 [shape = 'u8[4096]{0}', space=vmem, size = 0x1000, scoped, tag = 'output window, operand 1, single buffered']
    #allocation11 [shape = 's32[1]{0}', space=sflag, size = 0x4, scoped, tag = 'scoped memory for tpu_custom_call.1']
    #allocation12 [shape = 'u8[4096]{0}', space=vmem, size = 0x1000, scoped, tag = 'output window, operand 2, single buffered']
    %13 = vsyncpa [#allocation4], 0
    %14 = vsyncpa [#allocation7], 0
    %15 = vsyncpa [#allocation5], 0
    %16 = vsyncpa [#allocation11], 0
    // Predicated region
    $region2: #{tpu_custom_call.1} parent=1 // pred_check
      _
    $region3: #{tpu_custom_call.1} parent=1 // pred_check_branch
      %18 = sbr.rel (0) target = $region5
    $region4: #{tpu_custom_call.1} parent=1 // pred_region
      %20 = vsyncadd [#allocation4], 0
      %s22 = sshll.u32 %s0, 4
      %s23 = int_to_ptr.hbm [resolvable:$true] %s22
      %s24 = sshll.u32 [#allocation3], 4
      %s25 = int_to_ptr.vmem [resolvable:$true] %s24
      %27 = dma.hbm_to_vmem [thread:$0]  %s23, 128, %s25, [#allocation4]
    $region5: #{tpu_custom_call.1} parent=1 // pred_fallthru
      _
    // Predicated region
    $region6: #{tpu_custom_call.1} parent=1 // pred_check
      _
    $region7: #{tpu_custom_call.1} parent=1 // pred_check_branch
      %29 = sbr.rel (0) target = $region9
    $region8: #{tpu_custom_call.1} parent=1 // pred_region
      %31 = vsyncadd [#allocation7], 0
      %s32 = sshll.u32 %s1, 4
      %s33 = int_to_ptr.hbm [resolvable:$true] %s32
      %s34 = sshll.u32 [#allocation6], 4
      %s35 = int_to_ptr.vmem [resolvable:$true] %s34
      %40 = dma.hbm_to_vmem [thread:$0]  %s33, 2048, %s35, [#allocation7], 128, 128, 8
    $region9: #{tpu_custom_call.1} parent=1 // pred_fallthru
      _
    // Predicated region
    $region10: #{tpu_custom_call.1} parent=1 // pred_check
      _
    $region11: #{tpu_custom_call.1} parent=1 // pred_check_branch
      %42 = sbr.rel (0) target = $region13
    $region12: #{tpu_custom_call.1} parent=1 // pred_region
      _
    $region13: #{tpu_custom_call.1} parent=1 // pred_fallthru
      _
    // Predicated region
    $region14: #{tpu_custom_call.1} parent=1 // pred_check
      _
    $region15: #{tpu_custom_call.1} parent=1 // pred_check_branch
      %44 = sbr.rel (0) target = $region17
    $region16: #{tpu_custom_call.1} parent=1 // pred_region
      %46 = vsyncadd [#allocation7], 0
      %s47 = sshll.u32 %s3, 4
      %s48 = int_to_ptr.hbm [resolvable:$true] %s47
      %s49 = sshll.u32 [#allocation8], 4
      %s50 = int_to_ptr.vmem [resolvable:$true] %s49
      %55 = dma.hbm_to_vmem [thread:$0]  %s48, 2048, %s50, [#allocation7], 128, 128, 8
    $region17: #{tpu_custom_call.1} parent=1 // pred_fallthru
      _
    // Predicated region
    $region18: #{tpu_custom_call.1} parent=1 // pred_check
      _
    $region19: #{tpu_custom_call.1} parent=1 // pred_check_branch
      %57 = sbr.rel (0) target = $region21
    $region20: #{tpu_custom_call.1} parent=1 // pred_region
      _
    $region21: #{tpu_custom_call.1} parent=1 // pred_fallthru
      _
    // Predicated region
    $region22: #{tpu_custom_call.1} parent=1 // pred_check
      _
    $region23: #{tpu_custom_call.1} parent=1 // pred_check_branch
      %59 = sbr.rel (0) target = $region25
    $region24: #{tpu_custom_call.1} parent=1 // pred_region
      %61 = dma.done [#allocation4], 128
    $region25: #{tpu_custom_call.1} parent=1 // pred_fallthru
      _
    // Predicated region
    $region26: #{tpu_custom_call.1} parent=1 // pred_check
      _
    $region27: #{tpu_custom_call.1} parent=1 // pred_check_branch
      %63 = sbr.rel (0) target = $region29
    $region28: #{tpu_custom_call.1} parent=1 // pred_region
      %65 = dma.done [#allocation7], 2048
    $region29: #{tpu_custom_call.1} parent=1 // pred_fallthru
      _
    // Predicated region
    $region30: #{tpu_custom_call.1} parent=1 // pred_check
      _
    $region31: #{tpu_custom_call.1} parent=1 // pred_check_branch
      %67 = sbr.rel (0) target = $region33
    $region32: #{tpu_custom_call.1} parent=1 // pred_region
      %69 = dma.done [#allocation7], 2048
    $region33: #{tpu_custom_call.1} parent=1 // pred_fallthru
      _
    %p70 = scmp.eq.s32.totalorder 0, 0
    // Predicated region
    $region34: #{tpu_custom_call.1} parent=1 // pred_check
      %p71 = pneg %p70
    $region35: #{tpu_custom_call.1} parent=1 // pred_check_branch
      %73 = sbr.rel (%p71) target = $region37
    $region36: #{tpu_custom_call.1} parent=1 // pred_region
      %74 = vst [vmem:[#allocation2] sm:$0xff] 0.0
      %75 = vst [vmem:[#allocation12] sm:$0xff] 0.0
    $region37: #{tpu_custom_call.1} parent=1 // pred_fallthru
      _
    %v76 = vld [vmem:[#allocation3] sm:$0xff]
    %v77 = vld [vmem:[#allocation6] sm:$0xff]
    %v78 = vld [vmem:[#allocation6 + $0x8] sm:$0xff]
    %v79 = vld [vmem:[#allocation6 + $0x10] sm:$0xff]
    %v80 = vld [vmem:[#allocation6 + $0x18] sm:$0xff]
    %v81 = vld [vmem:[#allocation6 + $0x20] sm:$0xff]
    %v82 = vld [vmem:[#allocation6 + $0x28] sm:$0xff]
    %v83 = vld [vmem:[#allocation6 + $0x30] sm:$0xff]
    %v84 = vld [vmem:[#allocation6 + $0x38] sm:$0xff]
    %v85 = vld [vmem:[#allocation6 + $0x40] sm:$0xff]
    %v86 = vld [vmem:[#allocation6 + $0x48] sm:$0xff]
    %v87 = vld [vmem:[#allocation6 + $0x50] sm:$0xff]
    %v88 = vld [vmem:[#allocation6 + $0x58] sm:$0xff]
    %v89 = vld [vmem:[#allocation6 + $0x60] sm:$0xff]
    %v90 = vld [vmem:[#allocation6 + $0x68] sm:$0xff]
    %v91 = vld [vmem:[#allocation6 + $0x70] sm:$0xff]
    %v92 = vld [vmem:[#allocation6 + $0x78] sm:$0xff]
    %v93 = vld [vmem:[%s2] sm:$0x1]
    %v95 = vperm.slane %v93, 0
    %97 = vmatpush.msra.mxu0 %v92
    %98 = vmatpush.msra.mxu0 %v91
    %99 = vmatpush.msra.mxu0 %v90
    %100 = vmatpush.msra.mxu0 %v89
    %101 = vmatpush.msra.mxu0 %v88
    %102 = vmatpush.msra.mxu0 %v87
    %103 = vmatpush.msra.mxu0 %v86
    %104 = vmatpush.msra.mxu0 %v85
    %105 = vmatpush.msra.mxu0 %v84
    %106 = vmatpush.msra.mxu0 %v83
    %107 = vmatpush.msra.mxu0 %v82
    %108 = vmatpush.msra.mxu0 %v81
    %109 = vmatpush.msra.mxu0 %v80
    %110 = vmatpush.msra.mxu0 %v79
    %111 = vmatpush.msra.mxu0 %v78
    %112 = vmatpush.msra.mxu0 %v77
    %113 = vmatmul.f32.gmra.mxu0 %v76
    %v114 = vpop.f32.mrf.mxu0
    %v115 = vadd.f32 %v95, %v114
    %116 = vdwg.mxu0
    %v117 = vmax.f32 %v115, 0.0
    %118 = vst [vmem:[#allocation10] sm:$0xff] %v117
    %v119 = vld [vmem:[#allocation2] sm:$0xff]
    %v120 = vld [vmem:[#allocation8] sm:$0xff]
    %v121 = vld [vmem:[#allocation8 + $0x8] sm:$0xff]
    %v122 = vld [vmem:[#allocation8 + $0x10] sm:$0xff]
    %v123 = vld [vmem:[#allocation8 + $0x18] sm:$0xff]
    %v124 = vld [vmem:[#allocation8 + $0x20] sm:$0xff]
    %v125 = vld [vmem:[#allocation8 + $0x28] sm:$0xff]
    %v126 = vld [vmem:[#allocation8 + $0x30] sm:$0xff]
    %v127 = vld [vmem:[#allocation8 + $0x38] sm:$0xff]
    %v128 = vld [vmem:[#allocation8 + $0x40] sm:$0xff]
    %v129 = vld [vmem:[#allocation8 + $0x48] sm:$0xff]
    %v130 = vld [vmem:[#allocation8 + $0x50] sm:$0xff]
    %v131 = vld [vmem:[#allocation8 + $0x58] sm:$0xff]
    %v132 = vld [vmem:[#allocation8 + $0x60] sm:$0xff]
    %v133 = vld [vmem:[#allocation8 + $0x68] sm:$0xff]
    %v134 = vld [vmem:[#allocation8 + $0x70] sm:$0xff]
    %v135 = vld [vmem:[#allocation8 + $0x78] sm:$0xff]
    %136 = vmatpush.msra.mxu0 %v135
    %137 = vmatpush.msra.mxu0 %v134
    %138 = vmatpush.msra.mxu0 %v133
    %139 = vmatpush.msra.mxu0 %v132
    %140 = vmatpush.msra.mxu0 %v131
    %141 = vmatpush.msra.mxu0 %v130
    %142 = vmatpush.msra.mxu0 %v129
    %143 = vmatpush.msra.mxu0 %v128
    %144 = vmatpush.msra.mxu0 %v127
    %145 = vmatpush.msra.mxu0 %v126
    %146 = vmatpush.msra.mxu0 %v125
    %147 = vmatpush.msra.mxu0 %v124
    %148 = vmatpush.msra.mxu0 %v123
    %149 = vmatpush.msra.mxu0 %v122
    %150 = vmatpush.msra.mxu0 %v121
    %151 = vmatpush.msra.mxu0 %v120
    %152 = vmatmul.f32.gmra.mxu0 %v117
    %v153 = vpop.f32.mrf.mxu0
    %v154 = vadd.f32 0.0, %v153
    %155 = vdwg.mxu0
    %v156 = vadd.f32 %v119, %v154
    %157 = vst [vmem:[#allocation2] sm:$0xff] %v156
    %v158 = vlaneseq
    %v159 = vand.u32 %v158, 127
    %160 = vadd.xlane.f32.xlu0 %v117
    %v161 = vpop.xlane.xlu0 %160
    %v162 = vrot.slane %v161, 4
    %v163 = vadd.f32 %v161, %v162
    %v164 = vrot.slane %v163, 2
    %v165 = vadd.f32 %v163, %v164
    %v166 = vrot.slane %v165, 1
    %v167 = vadd.f32 %v165, %v166
    %s168 = vtos %v167
    %vm169 = vcmp.gt.f32.partialorder %v117, 0.0
    %v170 = vsel %vm169, 1, 0
    %v171 = vcvt.s32.f32 %v170
    %172 = vadd.xlane.f32.xlu0 %v171
    %v173 = vpop.xlane.xlu0 %172
    %v174 = vrot.slane %v173, 4
    %v175 = vadd.f32 %v173, %v174
    %v176 = vrot.slane %v175, 2
    %v177 = vadd.f32 %v175, %v176
    %v178 = vrot.slane %v177, 1
    %v179 = vadd.f32 %v177, %v178
    %s180 = vtos %v179
    %v181 = vld [vmem:[#allocation12] sm:$0xff]
    %vm182 = vcmp.eq.s32.totalorder %v159, 1
    %vm183 = vcmp.eq.s32.totalorder %v159, 2
    %v184 = vstv %s180
    %v185 = vsel %vm183, %v184, 0.0
    %v186 = vstv %s168
    %v187 = vsel %vm182, %v186, %v185
    %v188 = vadd.f32 %v181, %v187
    %189 = vst [vmem:[#allocation12] sm:$0xff] %v188
    // Predicated region
    $region38: #{tpu_custom_call.1} parent=1 // pred_check
      %p190 = pneg %p70
    $region39: #{tpu_custom_call.1} parent=1 // pred_check_branch
      %192 = sbr.rel (%p190) target = $region41
    $region40: #{tpu_custom_call.1} parent=1 // pred_region
      %v193 = vld [vmem:[#allocation2] sm:$0xff]
      %v194 = vld [vmem:[%s4] sm:$0x1]
      %v196 = vperm.slane %v194, 0
      %v198 = vadd.f32 %v193, %v196
      %199 = vst [vmem:[#allocation9] sm:$0xff] %v198
      %v200 = vsub.f32 %v198, %v76
      %v201 = vld [vmem:[#allocation12] sm:$0xff]
      %vm202 = vcmp.eq.s32.totalorder %v159, 0
      %v203 = vmul.f32 %v200, %v200
      %204 = vadd.xlane.f32.xlu0 %v203
      %v205 = vpop.xlane.xlu0 %204
      %v206 = vrot.slane %v205, 4
      %v207 = vadd.f32 %v205, %v206
      %v208 = vrot.slane %v207, 2
      %v209 = vadd.f32 %v207, %v208
      %v210 = vrot.slane %v209, 1
      %v211 = vadd.f32 %v209, %v210
      %s212 = vtos %v211
      %v213 = vstv %s212
      %v214 = vsel %vm202, %v213, 0.0
      %v215 = vadd.f32 %v201, %v214
      %216 = vst [vmem:[#allocation12] sm:$0xff] %v215
    $region41: #{tpu_custom_call.1} parent=1 // pred_fallthru
      _
    // Predicated region
    $region42: #{tpu_custom_call.1} parent=1 // pred_check
      _
    $region43: #{tpu_custom_call.1} parent=1 // pred_check_branch
      %218 = sbr.rel (0) target = $region45
    $region44: #{tpu_custom_call.1} parent=1 // pred_region
      %220 = vsyncadd [#allocation5], 0
      %s222 = sshll.u32 [#allocation9], 4
      %s223 = int_to_ptr.vmem [resolvable:$true] %s222
      %s224 = sshll.u32 %s5, 4
      %s225 = int_to_ptr.hbm [resolvable:$true] %s224
      %227 = dma.vmem_to_hbm [thread:$0]  %s223, 128, %s225, [#allocation5]
    $region45: #{tpu_custom_call.1} parent=1 // pred_fallthru
      _
    // Predicated region
    $region46: #{tpu_custom_call.1} parent=1 // pred_check
      _
    $region47: #{tpu_custom_call.1} parent=1 // pred_check_branch
      %229 = sbr.rel (0) target = $region49
    $region48: #{tpu_custom_call.1} parent=1 // pred_region
      %231 = vsyncadd [#allocation11], 0
      %s233 = sshll.u32 [#allocation10], 4
      %s234 = int_to_ptr.vmem [resolvable:$true] %s233
      %s235 = sshll.u32 %s6, 4
      %s236 = int_to_ptr.hbm [resolvable:$true] %s235
      %238 = dma.vmem_to_hbm [thread:$0]  %s234, 128, %s236, [#allocation11]
    $region49: #{tpu_custom_call.1} parent=1 // pred_fallthru
      _
    // Predicated region
    $region50: #{tpu_custom_call.1} parent=1 // pred_check
      _
    $region51: #{tpu_custom_call.1} parent=1 // pred_check_branch
      %240 = sbr.rel (0) target = $region53
    $region52: #{tpu_custom_call.1} parent=1 // pred_region
      %242 = vsyncadd [#allocation11], 0
      %s244 = sshll.u32 [#allocation12], 4
      %s245 = int_to_ptr.vmem [resolvable:$true] %s244
      %s246 = sshll.u32 %s7, 4
      %s247 = int_to_ptr.hbm [resolvable:$true] %s246
      %249 = dma.vmem_to_hbm [thread:$0]  %s245, 128, %s247, [#allocation11]
    $region53: #{tpu_custom_call.1} parent=1 // pred_fallthru
      _
    // Predicated region
    $region54: #{tpu_custom_call.1} parent=1 // pred_check
      _
    $region55: #{tpu_custom_call.1} parent=1 // pred_check_branch
      %251 = sbr.rel (0) target = $region57
    $region56: #{tpu_custom_call.1} parent=1 // pred_region
      %253 = dma.done [#allocation5], 128
    $region57: #{tpu_custom_call.1} parent=1 // pred_fallthru
      _
    // Predicated region
    $region58: #{tpu_custom_call.1} parent=1 // pred_check
      _
    $region59: #{tpu_custom_call.1} parent=1 // pred_check_branch
      %255 = sbr.rel (0) target = $region61
    $region60: #{tpu_custom_call.1} parent=1 // pred_region
      %257 = dma.done [#allocation11], 128
    $region61: #{tpu_custom_call.1} parent=1 // pred_fallthru
      _
    // Predicated region
    $region62: #{tpu_custom_call.1} parent=1 // pred_check
      _
    $region63: #{tpu_custom_call.1} parent=1 // pred_check_branch
      %259 = sbr.rel (0) target = $region65
    $region64: #{tpu_custom_call.1} parent=1 // pred_region
      %261 = dma.done [#allocation11], 128
    $region65: #{tpu_custom_call.1} parent=1 // pred_fallthru
      _
    %262 = vsyncpa [#allocation4], 1
    %263 = vsyncpa [#allocation7], 1
    %264 = vsyncpa [#allocation5], 1
    %265 = vsyncpa [#allocation11], 1

</llo_original>
